<compile_context>
chip_gen: v7x
topology: tpu7x:2x2x1
jax: 0.10.0
libtpu: 0.0.40
codegen_flags: <defaults>
</compile_context>

<pallas_src>
import jax
import jax.numpy as jnp
from jax.experimental import pallas as pl
from jax.experimental.pallas import tpu as pltpu

_TILE_ROWS = 512          # 512 x 1024 x 4B = 2 MiB per f32 buffer; 2 in + 2 out
                          # double-buffers = 8 MiB + elementwise temps, well under
                          # the 32 MiB limit requested below on every generation.
_MAX_LANES = 1024         # lane width: multiple of 128 -> unmasked full-lane vst
_PALLAS_MIN_ELEMS = 128   # demo-friendly cutoff so the small test tensors still
                          # exercise the kernel; bump to ~1<<16 in production.


def _mish_affine_kernel(x_ref, o_ref):
    """o = mish(x*2 - 1) elementwise."""
    x = x_ref[...].astype(jnp.float32)
    x = x * 2.0 - 1.0
    # mish(x) = x * tanh(softplus(x)).  With e = exp(x), n = e*(e+2):
    #   tanh(log1p(e)) = n / (n + 2)
    # -> 1 exp + 1 reciprocal on the EUP instead of exp + log + tanh.
    xc = jnp.minimum(x, 20.0)            # clamp before exp: no f32 overflow
    e = jnp.exp(xc)
    n = e * (e + 2.0)
    # approx=False: same single EUP vrcp; Newton refinement runs on the VPU
    # (slack in a mem-bound kernel) and keeps full f32 accuracy.
    y = x * n * pl.reciprocal(n + 2.0, approx=False)
    # For x > 20, tanh(softplus(x)) == 1 to f32 precision -> mish(x) == x.
    o_ref[...] = jnp.where(x > 20.0, x, y).astype(o_ref.dtype)


def _mish_affine_jnp(t):
    """Plain-XLA path for tiny or non-lane-aligned tensors."""
    t = t * 2.0 - 1.0
    return (t * jnp.tanh(jax.nn.softplus(t))).astype(t.dtype)


def _pick_lanes(n):
    """Largest multiple of 128 (<= _MAX_LANES) that divides n, else None."""
    for lanes in range(_MAX_LANES, 0, -128):
        if n % lanes == 0:
            return lanes
    return None


def _mish_affine_pallas(t):
    """One lane-dense, tiled, pipelined pallas_call over a single tensor."""
    n = t.size
    lanes = _pick_lanes(n)
    rows = n // lanes
    slab = t.reshape(rows, lanes)          # metadata-only for contiguous arrays
    block_rows = min(_TILE_ROWS, rows)     # full-dim block allowed when rows<512
    grid = (pl.cdiv(rows, block_rows),)    # partial last block: Pallas masks it

    out_slab = pl.pallas_call(
        _mish_affine_kernel,
        out_shape=jax.ShapeDtypeStruct(slab.shape, t.dtype),
        grid=grid,
        in_specs=[pl.BlockSpec((block_rows, lanes), lambda i: (i, 0))],
        out_specs=pl.BlockSpec((block_rows, lanes), lambda i: (i, 0)),
        compiler_params=pltpu.CompilerParams(
            dimension_semantics=("parallel",),   # shard blocks across v7x's 2 TCs
            vmem_limit_bytes=32 * 1024 * 1024,
        ),
    )(slab)
    return out_slab.reshape(t.shape)


def _mish_affine(t):
    n = t.size
    if n >= _PALLAS_MIN_ELEMS and n % 128 == 0:
        return _mish_affine_pallas(t)
    # Tiny or not reshapeable to (rows, k*128) without a pad copy: XLA's fused
    # elementwise chain is already at the HBM roofline for this op.
    return _mish_affine_jnp(t)


@jax.jit
def model_forward(x, y, z, w):
    # PyTorch reference: t = t*2 - 1; F.mish(t) == t * tanh(softplus(t)) per tensor.
    return tuple(_mish_affine(t) for t in (x, y, z, w))


def _ref_mish_affine(t):
    t = t * 2.0 - 1.0
    return t * jnp.tanh(jnp.logaddexp(t, 0.0))


if __name__ == "__main__":
    key = jax.random.PRNGKey(0)
    kx, ky, kz, kw = jax.random.split(key, 4)
    # Mixed-rank inputs mirroring the original test, kept small.
    x = jax.random.uniform(kx, (2, 16), dtype=jnp.float32)          # 32 elems  -> jnp path
    y = jax.random.uniform(ky, (2, 4, 16), dtype=jnp.float32)       # 128 elems -> Pallas
    z = jax.random.uniform(kz, (2, 4, 12, 16), dtype=jnp.float32)   # 1536 elems-> Pallas
    w = jax.random.uniform(kw, (2, 3, 4, 5, 11), dtype=jnp.float32) # 1320 (not %128) -> jnp

    outs = model_forward(x, y, z, w)
    outs = jax.block_until_ready(outs)

    refs = tuple(_ref_mish_affine(t) for t in (x, y, z, w))
    for o, r in zip(outs, refs):
        assert o.shape == r.shape and o.dtype == r.dtype
        assert jnp.max(jnp.abs(o - r)) < 1e-5

    print("KERNEL_OK")
</pallas_src>

<mosaic_0001>
module attributes {stable_mosaic.version = 11 : i64} {
  func.func @_mish_affine_kernel(%arg0: i32, %arg1: memref<2x768xf32, #tpu.memory_space<vmem>>, %arg2: memref<2x768xf32, #tpu.memory_space<vmem>>) attributes {dimension_semantics = [#tpu.dimension_semantics<parallel>], iteration_bounds = array<i64: 1>, scalar_prefetch = 0 : i64, scratch_operands = 0 : i64, tpu.core_type = #tpu.core_type<tc>, window_params = [{transform_indices = @transform_0, window_bounds = array<i64: 2, 768>}, {transform_indices = @transform_1, window_bounds = array<i64: 2, 768>}]} {
    %c0 = arith.constant 0 : index
    %c0_0 = arith.constant 0 : index
    %0 = vector.load %arg1[%c0, %c0_0] : memref<2x768xf32, #tpu.memory_space<vmem>>, vector<2x768xf32>
    %cst = arith.constant 2.000000e+00 : f32
    %1 = vector.broadcast %cst : f32 to vector<2x768xf32>
    %2 = arith.mulf %0, %1 : vector<2x768xf32>
    %cst_1 = arith.constant 1.000000e+00 : f32
    %3 = vector.broadcast %cst_1 : f32 to vector<2x768xf32>
    %4 = arith.subf %2, %3 : vector<2x768xf32>
    %cst_2 = arith.constant 2.000000e+01 : f32
    %5 = vector.broadcast %cst_2 : f32 to vector<2x768xf32>
    %6 = arith.minimumf %4, %5 : vector<2x768xf32>
    %7 = math.exp %6 : vector<2x768xf32>
    %cst_3 = arith.constant 2.000000e+00 : f32
    %8 = vector.broadcast %cst_3 : f32 to vector<2x768xf32>
    %9 = arith.addf %7, %8 : vector<2x768xf32>
    %10 = arith.mulf %7, %9 : vector<2x768xf32>
    %11 = arith.mulf %4, %10 : vector<2x768xf32>
    %cst_4 = arith.constant 2.000000e+00 : f32
    %12 = vector.broadcast %cst_4 : f32 to vector<2x768xf32>
    %13 = arith.addf %10, %12 : vector<2x768xf32>
    %14 = tpu.reciprocal %13 : vector<2x768xf32> -> vector<2x768xf32>
    %15 = arith.mulf %11, %14 : vector<2x768xf32>
    %cst_5 = arith.constant 2.000000e+01 : f32
    %16 = vector.broadcast %cst_5 : f32 to vector<2x768xf32>
    %17 = arith.cmpf ogt, %4, %16 : vector<2x768xf32>
    %18 = arith.select %17, %4, %15 : vector<2x768xi1>, vector<2x768xf32>
    %c0_6 = arith.constant 0 : index
    %c0_7 = arith.constant 0 : index
    %19 = vector.load %arg2[%c0_6, %c0_7] : memref<2x768xf32, #tpu.memory_space<vmem>>, vector<2x768xf32>
    tpu.vector_store %arg2[%c0_6, %c0_7], %18 {strides = array<i32>} : memref<2x768xf32, #tpu.memory_space<vmem>>, vector<2x768xf32>,
    return
  }
  func.func @transform_0(%arg0: i32) -> (i32, i32) {
    %c0_i32 = arith.constant 0 : i32
    %c0_i32_0 = arith.constant 0 : i32
    return %arg0, %c0_i32 : i32, i32
  }
  func.func @transform_1(%arg0: i32) -> (i32, i32) {
    %c0_i32 = arith.constant 0 : i32
    %c0_i32_0 = arith.constant 0 : i32
    return %arg0, %c0_i32 : i32, i32
  }
}

module attributes {stable_mosaic.version = 11 : i64} {
  func.func @_mish_affine_kernel(%arg0: i32, %arg1: memref<1x128xf32, #tpu.memory_space<vmem>>, %arg2: memref<1x128xf32, #tpu.memory_space<vmem>>) attributes {dimension_semantics = [#tpu.dimension_semantics<parallel>], iteration_bounds = array<i64: 1>, scalar_prefetch = 0 : i64, scratch_operands = 0 : i64, tpu.core_type = #tpu.core_type<tc>, window_params = [{transform_indices = @transform_0, window_bounds = array<i64: 1, 128>}, {transform_indices = @transform_1, window_bounds = array<i64: 1, 128>}]} {
    %c0 = arith.constant 0 : index
    %c0_0 = arith.constant 0 : index
    %0 = vector.load %arg1[%c0, %c0_0] : memref<1x128xf32, #tpu.memory_space<vmem>>, vector<1x128xf32>
    %cst = arith.constant 2.000000e+00 : f32
    %1 = vector.broadcast %cst : f32 to vector<1x128xf32>
    %2 = arith.mulf %0, %1 : vector<1x128xf32>
    %cst_1 = arith.constant 1.000000e+00 : f32
    %3 = vector.broadcast %cst_1 : f32 to vector<1x128xf32>
    %4 = arith.subf %2, %3 : vector<1x128xf32>
    %cst_2 = arith.constant 2.000000e+01 : f32
    %5 = vector.broadcast %cst_2 : f32 to vector<1x128xf32>
    %6 = arith.minimumf %4, %5 : vector<1x128xf32>
    %7 = math.exp %6 : vector<1x128xf32>
    %cst_3 = arith.constant 2.000000e+00 : f32
    %8 = vector.broadcast %cst_3 : f32 to vector<1x128xf32>
    %9 = arith.addf %7, %8 : vector<1x128xf32>
    %10 = arith.mulf %7, %9 : vector<1x128xf32>
    %11 = arith.mulf %4, %10 : vector<1x128xf32>
    %cst_4 = arith.constant 2.000000e+00 : f32
    %12 = vector.broadcast %cst_4 : f32 to vector<1x128xf32>
    %13 = arith.addf %10, %12 : vector<1x128xf32>
    %14 = tpu.reciprocal %13 : vector<1x128xf32> -> vector<1x128xf32>
    %15 = arith.mulf %11, %14 : vector<1x128xf32>
    %cst_5 = arith.constant 2.000000e+01 : f32
    %16 = vector.broadcast %cst_5 : f32 to vector<1x128xf32>
    %17 = arith.cmpf ogt, %4, %16 : vector<1x128xf32>
    %18 = arith.select %17, %4, %15 : vector<1x128xi1>, vector<1x128xf32>
    %c0_6 = arith.constant 0 : index
    %c0_7 = arith.constant 0 : index
    %19 = vector.load %arg2[%c0_6, %c0_7] : memref<1x128xf32, #tpu.memory_space<vmem>>, vector<1x128xf32>
    tpu.vector_store %arg2[%c0_6, %c0_7], %18 {strides = array<i32>} : memref<1x128xf32, #tpu.memory_space<vmem>>, vector<1x128xf32>,
    return
  }
  func.func @transform_0(%arg0: i32) -> (i32, i32) {
    %c0_i32 = arith.constant 0 : i32
    %c0_i32_0 = arith.constant 0 : i32
    return %arg0, %c0_i32 : i32, i32
  }
  func.func @transform_1(%arg0: i32) -> (i32, i32) {
    %c0_i32 = arith.constant 0 : i32
    %c0_i32_0 = arith.constant 0 : i32
    return %arg0, %c0_i32 : i32, i32
  }
}

</mosaic_0001>

<llo_original>
// kernel: model_forward.3
$region0: #{model_forward.3}
  #allocation0 [shape = 'u32[]', space=smem, size = 0x4, offset = 0x4, fixed_abs, tag = 'smem constant byte address 0x4 - core index']
  #allocation1 [shape = 'u32[144,128]{1,0:T(1,128)}', space=vmem, size = 0x12000, scoped, tag = 'internal scratch']
  %s0 = inlined_call_operand.vmem [shape: f32[2,768], index: 0, kind: input, shape index: {}]
  %s1 = inlined_call_operand.vmem [shape: f32[2,768], index: 1, kind: output, shape index: {}]
  %s2 = sld [smem:[#allocation0]]
  $region14: #{model_forward.3} parent=0
    _
  %s4 = ssub.s32 1, %s2
  %s5 = scalar_select 0, %s4, %s2
  // Predicated region
  $region2: #{model_forward.3} parent=0 // pred_check
    _
  $region3: #{model_forward.3} parent=0 // pred_check_branch
    %7 = sbr.rel (0) target = $region5
  $region4: #{model_forward.3} parent=0 // pred_region
    _
  $region5: #{model_forward.3} parent=0 // pred_fallthru
    _
  %v8 = vld [vmem:[%s0] sm:$0xff]
  %v9 = vld [vmem:[%s0 + $0x8] sm:$0xf]
  %v10 = vmul.f32 %v8, 2.0
  %v11 = vmul.f32 %v9, 2.0
  %v12 = vsub.f32 %v10, 1.0
  %v13 = vsub.f32 %v11, 1.0
  %v14 = vmin.f32 %v12, 20.0
  %v15 = vmin.f32 %v13, 20.0
  %v16 = vmul.f32 %v14, 1.442695
  %v17 = vpow.pop %v16
  %v18 = vmul.f32 %v15, 1.442695
  %v19 = vpow.pop %v18
  %v20 = vadd.f32 %v17, 2.0
  %v21 = vadd.f32 %v19, 2.0
  %v22 = vmul.f32 %v17, %v20
  %v23 = vmul.f32 %v19, %v21
  %v24 = vmul.f32 %v12, %v22
  %v25 = vmul.f32 %v13, %v23
  %v26 = vadd.f32 %v22, 2.0
  %v27 = vadd.f32 %v23, 2.0
  %v28 = vrcp.pop %v26
  %v29 = vrcp.pop %v27
  %v30 = vmul.f32 %v24, %v28
  %v31 = vmul.f32 %v25, %v29
  %vm32 = vcmp.gt.f32.partialorder %v12, 20.0
  %vm33 = vcmp.gt.f32.partialorder %v13, 20.0
  %v34 = vsel %vm32, %v12, %v30
  %v35 = vsel %vm33, %v13, %v31
  %36 = vst [vmem:[%s1] sm:$0xff] %v34
  %37 = vst [vmem:[%s1 + $0x8] sm:$0xf] %v35
  // Predicated region
  $region6: #{model_forward.3} parent=0 // pred_check
    _
  $region7: #{model_forward.3} parent=0 // pred_check_branch
    %39 = sbr.rel (0) target = $region9
  $region8: #{model_forward.3} parent=0 // pred_region
    _
  $region9: #{model_forward.3} parent=0 // pred_fallthru
    _
  // Predicated region
  $region10: #{model_forward.3} parent=0 // pred_check
    _
  $region11: #{model_forward.3} parent=0 // pred_check_branch
    %41 = sbr.rel (0) target = $region13
  $region12: #{model_forward.3} parent=0 // pred_region
    _
  $region13: #{model_forward.3} parent=0 // pred_fallthru
    _

// kernel: model_forward.2
$region0: #{model_forward.2}
  #allocation0 [shape = 'u32[]', space=smem, size = 0x4, offset = 0x4, fixed_abs, tag = 'smem constant byte address 0x4 - core index']
  #allocation1 [shape = 'u32[144,128]{1,0:T(1,128)}', space=vmem, size = 0x12000, scoped, tag = 'internal scratch']
  %s0 = inlined_call_operand.vmem [shape: f32[1,128], index: 0, kind: input, shape index: {}]
  %s1 = inlined_call_operand.vmem [shape: f32[1,128], index: 1, kind: output, shape index: {}]
  %s2 = sld [smem:[#allocation0]]
  $region14: #{model_forward.2} parent=0
    _
  %s4 = ssub.s32 1, %s2
  %s5 = scalar_select 0, %s4, %s2
  // Predicated region
  $region2: #{model_forward.2} parent=0 // pred_check
    _
  $region3: #{model_forward.2} parent=0 // pred_check_branch
    %7 = sbr.rel (0) target = $region5
  $region4: #{model_forward.2} parent=0 // pred_region
    _
  $region5: #{model_forward.2} parent=0 // pred_fallthru
    _
  %v8 = vld [vmem:[%s0] sm:$0x1]
  %v9 = vmul.f32 %v8, 2.0
  %v10 = vsub.f32 %v9, 1.0
  %v11 = vmin.f32 %v10, 20.0
  %v12 = vmul.f32 %v11, 1.442695
  %v13 = vpow.pop %v12
  %v14 = vadd.f32 %v13, 2.0
  %v15 = vmul.f32 %v13, %v14
  %v16 = vmul.f32 %v10, %v15
  %v17 = vadd.f32 %v15, 2.0
  %v18 = vrcp.pop %v17
  %v19 = vmul.f32 %v16, %v18
  %vm20 = vcmp.gt.f32.partialorder %v10, 20.0
  %v21 = vsel %vm20, %v10, %v19
  %22 = vst [vmem:[%s1] sm:$0x1] %v21
  // Predicated region
  $region6: #{model_forward.2} parent=0 // pred_check
    _
  $region7: #{model_forward.2} parent=0 // pred_check_branch
    %24 = sbr.rel (0) target = $region9
  $region8: #{model_forward.2} parent=0 // pred_region
    _
  $region9: #{model_forward.2} parent=0 // pred_fallthru
    _
  // Predicated region
  $region10: #{model_forward.2} parent=0 // pred_check
    _
  $region11: #{model_forward.2} parent=0 // pred_check_branch
    %26 = sbr.rel (0) target = $region13
  $region12: #{model_forward.2} parent=0 // pred_region
    _
  $region13: #{model_forward.2} parent=0 // pred_fallthru
    _

</llo_original>
